<compile_context>
chip_gen: v7x
topology: tpu7x:2x2x1
jax: 0.10.0
libtpu: 0.0.40
codegen_flags: <defaults>
</compile_context>

<pallas_src>
import numpy as np
import jax
import jax.numpy as jnp
from jax.experimental import pallas as pl
from jax.experimental.pallas import tpu as pltpu

_LANES = 128
_CHUNK_ROWS = 128   # <= 255 so each packed 8-bit field stays below 256


def _make_precision_count_kernel(num_classes, c_pad, tile_rows):
    C = int(num_classes)
    use_packed = C <= 4   # 4 classes x 8-bit fields per int32 lane counter

    def kernel(pr_ref, gt_ref, tp_out, pp_out, gc_out, tp_acc, pp_acc, gc_acc):
        step = pl.program_id(1)

        @pl.when(step == 0)
        def _init():
            tp_acc[...] = jnp.zeros_like(tp_acc)
            pp_acc[...] = jnp.zeros_like(pp_acc)
            gc_acc[...] = jnp.zeros_like(gc_acc)

        if use_packed:
            # Bit-packed per-lane counters: increment field `label` by one per
            # element.  Sentinel / out-of-range labels give a zero increment
            # ((pr < C) == 0), so shifting by (pr & 3)*8 is always harmless.
            r0 = 0
            while r0 < tile_rows:
                cr = min(_CHUNK_ROWS, tile_rows - r0)
                pr = pr_ref[r0:r0 + cr, :]
                gt = gt_ref[r0:r0 + cr, :]
                pr_ok = (pr < C).astype(jnp.int32)
                gt_ok = (gt < C).astype(jnp.int32)
                inc_pp = pr_ok << ((pr & 3) << 3)
                inc_gc = gt_ok << ((gt & 3) << 3)
                inc_tp = jnp.where(pr == gt, inc_pp, 0)
                pp_pack = jnp.sum(inc_pp, axis=0, keepdims=True)   # (1,128)
                gc_pack = jnp.sum(inc_gc, axis=0, keepdims=True)
                tp_pack = jnp.sum(inc_tp, axis=0, keepdims=True)
                # Unpack the C 8-bit fields into the int32 per-class scratch.
                for c in range(C):
                    sh = 8 * c
                    tp_acc[c:c + 1, :] += (tp_pack >> sh) & 0xFF
                    pp_acc[c:c + 1, :] += (pp_pack >> sh) & 0xFF
                    gc_acc[c:c + 1, :] += (gc_pack >> sh) & 0xFF
                r0 += cr
        else:
            # Fallback for larger C: per-class compare + sublane reduction,
            # accumulated directly into each class row (no concat / pad RMW).
            pr = pr_ref[...]
            gt = gt_ref[...]
            for c in range(C):
                pm = pr == c
                gm = gt == c
                tp_acc[c:c + 1, :] += jnp.sum((pm & gm).astype(jnp.int32),
                                              axis=0, keepdims=True)
                pp_acc[c:c + 1, :] += jnp.sum(pm.astype(jnp.int32),
                                              axis=0, keepdims=True)
                gc_acc[c:c + 1, :] += jnp.sum(gm.astype(jnp.int32),
                                              axis=0, keepdims=True)

        @pl.when(step == pl.num_programs(1) - 1)
        def _finalize():
            # Collapse the 128 lane partials -> per-class counts for this split.
            tp_out[0, :, :] = jnp.sum(tp_acc[...], axis=1, keepdims=True)
            pp_out[0, :, :] = jnp.sum(pp_acc[...], axis=1, keepdims=True)
            gc_out[0, :, :] = jnp.sum(gc_acc[...], axis=1, keepdims=True)

    return kernel


def precision_weighted(y_pr, y_gt, num_classes, *, max_tile_rows=2048,
                       num_splits=None):
    """Pallas-backed weighted precision (sklearn 'weighted' average).

    y_pr, y_gt: integer label arrays (flattened), labels in [0, num_classes).
    Returns a float32 scalar.  Empty input returns 0.0.  Out-of-range labels
    are excluded from both numerator and denominator.
    """
    def cdiv(a, b):
        return -(-a // b)

    n = int(y_pr.size)
    C = int(num_classes)
    assert max_tile_rows >= 8 and max_tile_rows % 8 == 0

    rows_needed = max(1, cdiv(n, _LANES))
    tile_rows = min(int(max_tile_rows), cdiv(rows_needed, 8) * 8)
    n_tiles = cdiv(rows_needed, tile_rows)
    if num_splits is None:
        # Leading "parallel" grid axis: shards the sample range across the two
        # TensorCores on v7x; runs sequentially (and harmlessly) on v5e/v6e.
        num_splits = 2 if n_tiles >= 2 else 1
    tiles_per_split = cdiv(n_tiles, num_splits)
    total_rows = num_splits * tiles_per_split * tile_rows
    padded_n = total_rows * _LANES

    c_pad = max(8, cdiv(C, 8) * 8)

    # Minimal padding: append only the sentinel tail (sentinel == C matches no
    # class), then a free reshape to the dense (rows, 128) lane layout.
    pr = jnp.asarray(y_pr).reshape(-1).astype(jnp.int32)
    gt = jnp.asarray(y_gt).reshape(-1).astype(jnp.int32)
    pad = padded_n - n
    if pad:
        tail = jnp.full((pad,), C, dtype=jnp.int32)
        pr = jnp.concatenate([pr, tail])
        gt = jnp.concatenate([gt, tail])
    pr2 = pr.reshape(total_rows, _LANES)
    gt2 = gt.reshape(total_rows, _LANES)

    count_shape = jax.ShapeDtypeStruct((num_splits, c_pad, 1), jnp.int32)
    data_spec = pl.BlockSpec(
        (tile_rows, _LANES),
        lambda s, i, tps=tiles_per_split: (s * tps + i, 0))
    count_spec = pl.BlockSpec((1, c_pad, 1), lambda s, i: (s, 0, 0))

    tp, pp, gc = pl.pallas_call(
        _make_precision_count_kernel(C, c_pad, tile_rows),
        out_shape=(count_shape, count_shape, count_shape),
        grid_spec=pltpu.PrefetchScalarGridSpec(
            num_scalar_prefetch=0,
            grid=(num_splits, tiles_per_split),
            in_specs=[data_spec, data_spec],
            out_specs=(count_spec, count_spec, count_spec),
            scratch_shapes=[pltpu.VMEM((c_pad, _LANES), jnp.int32)] * 3,
        ),
        compiler_params=pltpu.CompilerParams(
            dimension_semantics=("parallel", "arbitrary"),
            vmem_limit_bytes=32 * 1024 * 1024,
        ),
    )(pr2, gt2)

    # Tiny O(C) epilogue in plain XLA: combine per-split counts, form the
    # sklearn-style weighted precision (zero_division -> 0.0).
    tp = jnp.sum(tp[:, :, 0], axis=0).astype(jnp.float32)   # (c_pad,)
    pp = jnp.sum(pp[:, :, 0], axis=0).astype(jnp.float32)
    gc = jnp.sum(gc[:, :, 0], axis=0).astype(jnp.float32)
    prec = jnp.where(pp > 0.0, tp / jnp.maximum(pp, 1.0), 0.0)
    num = jnp.sum(gc * prec)
    den = jnp.sum(gc)          # == n when all ground-truth labels are in range
    return jnp.where(den > 0.0, num / jnp.maximum(den, 1.0), jnp.float32(0.0))


def _reference_precision_weighted(y_pr, y_gt):
    """Pure-numpy replica of sklearn precision_score(..., average='weighted',
    labels=np.unique(concat(y_pr, y_gt))) for cross-checking."""
    y_pr = np.asarray(y_pr)
    y_gt = np.asarray(y_gt)
    labels = np.unique(np.concatenate((y_pr, y_gt), axis=0))
    total = 0.0
    weight_sum = 0.0
    for l in labels:
        tp = float(np.sum((y_pr == l) & (y_gt == l)))
        pc = float(np.sum(y_pr == l))
        gc = float(np.sum(y_gt == l))
        prec = tp / pc if pc > 0 else 0.0
        total += gc * prec
        weight_sum += gc
    return total / weight_sum


if __name__ == "__main__":
    key = jax.random.PRNGKey(0)
    k1, k2, k3, k4, k5, k6, k7, k8 = jax.random.split(key, 8)

    # Case 1: module-sized workload (N=128 samples, 4 classes -> packed path).
    N1, C1 = 128, 4
    y_pr1 = jax.random.randint(k1, (N1,), 0, C1, dtype=jnp.int32)
    y_gt1 = jax.random.randint(k2, (N1,), 0, C1, dtype=jnp.int32)
    res1 = jax.block_until_ready(precision_weighted(y_pr1, y_gt1, C1))
    ref1 = _reference_precision_weighted(np.array(y_pr1), np.array(y_gt1))
    np.testing.assert_allclose(float(res1), ref1, rtol=1e-5, atol=1e-6)

    # Case 2: multi-tile grid + ragged tail + 2-way split (accumulation test).
    N2, C2 = 3000, 4
    y_pr2 = jax.random.randint(k3, (N2,), 0, C2, dtype=jnp.int32)
    y_gt2 = jax.random.randint(k4, (N2,), 0, C2, dtype=jnp.int32)
    res2 = jax.block_until_ready(
        precision_weighted(y_pr2, y_gt2, C2, max_tile_rows=8))
    ref2 = _reference_precision_weighted(np.array(y_pr2), np.array(y_gt2))
    np.testing.assert_allclose(float(res2), ref2, rtol=1e-5, atol=1e-6)

    # Case 3: fallback per-class path (C > 4).
    N3, C3 = 640, 6
    y_pr3 = jax.random.randint(k5, (N3,), 0, C3, dtype=jnp.int32)
    y_gt3 = jax.random.randint(k6, (N3,), 0, C3, dtype=jnp.int32)
    res3 = jax.block_until_ready(precision_weighted(y_pr3, y_gt3, C3))
    ref3 = _reference_precision_weighted(np.array(y_pr3), np.array(y_gt3))
    np.testing.assert_allclose(float(res3), ref3, rtol=1e-5, atol=1e-6)

    # Case 4: N a multiple of 128 (no wrapper padding at all), default tiles.
    N4, C4 = 2048, 3
    y_pr4 = jax.random.randint(k7, (N4,), 0, C4, dtype=jnp.int32)
    y_gt4 = jax.random.randint(k8, (N4,), 0, C4, dtype=jnp.int32)
    res4 = jax.block_until_ready(precision_weighted(y_pr4, y_gt4, C4))
    ref4 = _reference_precision_weighted(np.array(y_pr4), np.array(y_gt4))
    np.testing.assert_allclose(float(res4), ref4, rtol=1e-5, atol=1e-6)

    print("KERNEL_OK")
</pallas_src>

<mosaic_0001>
module attributes {stable_mosaic.version = 11 : i64} {
  func.func @kernel(%arg0: i32, %arg1: i32, %arg2: memref<8x128xi32, #tpu.memory_space<vmem>>, %arg3: memref<8x128xi32, #tpu.memory_space<vmem>>, %arg4: memref<1x8x1xi32, #tpu.memory_space<vmem>>, %arg5: memref<1x8x1xi32, #tpu.memory_space<vmem>>, %arg6: memref<1x8x1xi32, #tpu.memory_space<vmem>>, %arg7: memref<8x128xi32, #tpu.memory_space<vmem>>, %arg8: memref<8x128xi32, #tpu.memory_space<vmem>>, %arg9: memref<8x128xi32, #tpu.memory_space<vmem>>) attributes {dimension_semantics = [#tpu.dimension_semantics<parallel>, #tpu.dimension_semantics<arbitrary>], iteration_bounds = array<i64: 1, 1>, scalar_prefetch = 0 : i64, scratch_operands = 3 : i64, tpu.core_type = #tpu.core_type<tc>, window_params = [{transform_indices = @transform_0, window_bounds = array<i64: 8, 128>}, {transform_indices = @transform_1, window_bounds = array<i64: 8, 128>}, {transform_indices = @transform_2, window_bounds = array<i64: 1, 8, 1>}, {transform_indices = @transform_3, window_bounds = array<i64: 1, 8, 1>}, {transform_indices = @transform_4, window_bounds = array<i64: 1, 8, 1>}]} {
    %c0_i32 = arith.constant 0 : i32
    %0 = arith.cmpi eq, %arg1, %c0_i32 : i32
    %1 = arith.extui %0 : i1 to i32
    %c0_i32_0 = arith.constant 0 : i32
    %2 = arith.cmpi ne, %1, %c0_i32_0 : i32
    scf.if %2 {
      %c0_i32_78 = arith.constant 0 : i32
      %117 = vector.broadcast %c0_i32_78 : i32 to vector<8x128xi32>
      %c0_79 = arith.constant 0 : index
      %c0_80 = arith.constant 0 : index
      %118 = vector.load %arg7[%c0_79, %c0_80] : memref<8x128xi32, #tpu.memory_space<vmem>>, vector<8x128xi32>
      tpu.vector_store %arg7[%c0_79, %c0_80], %117 {strides = array<i32>} : memref<8x128xi32, #tpu.memory_space<vmem>>, vector<8x128xi32>,
      %c0_i32_81 = arith.constant 0 : i32
      %119 = vector.broadcast %c0_i32_81 : i32 to vector<8x128xi32>
      %c0_82 = arith.constant 0 : index
      %c0_83 = arith.constant 0 : index
      %120 = vector.load %arg8[%c0_82, %c0_83] : memref<8x128xi32, #tpu.memory_space<vmem>>, vector<8x128xi32>
      tpu.vector_store %arg8[%c0_82, %c0_83], %119 {strides = array<i32>} : memref<8x128xi32, #tpu.memory_space<vmem>>, vector<8x128xi32>,
      %c0_i32_84 = arith.constant 0 : i32
      %121 = vector.broadcast %c0_i32_84 : i32 to vector<8x128xi32>
      %c0_85 = arith.constant 0 : index
      %c0_86 = arith.constant 0 : index
      %122 = vector.load %arg9[%c0_85, %c0_86] : memref<8x128xi32, #tpu.memory_space<vmem>>, vector<8x128xi32>
      tpu.vector_store %arg9[%c0_85, %c0_86], %121 {strides = array<i32>} : memref<8x128xi32, #tpu.memory_space<vmem>>, vector<8x128xi32>,
    } else {
    }
    %c0 = arith.constant 0 : index
    %c0_1 = arith.constant 0 : index
    %3 = vector.load %arg2[%c0, %c0_1] : memref<8x128xi32, #tpu.memory_space<vmem>>, vector<8x128xi32>
    %c0_2 = arith.constant 0 : index
    %c0_3 = arith.constant 0 : index
    %4 = vector.load %arg3[%c0_2, %c0_3] : memref<8x128xi32, #tpu.memory_space<vmem>>, vector<8x128xi32>
    %c4_i32 = arith.constant 4 : i32
    %5 = vector.broadcast %c4_i32 : i32 to vector<8x128xi32>
    %6 = arith.cmpi slt, %3, %5 : vector<8x128xi32>
    %7 = arith.extui %6 : vector<8x128xi1> to vector<8x128xi32>
    %c4_i32_4 = arith.constant 4 : i32
    %8 = vector.broadcast %c4_i32_4 : i32 to vector<8x128xi32>
    %9 = arith.cmpi slt, %4, %8 : vector<8x128xi32>
    %10 = arith.extui %9 : vector<8x128xi1> to vector<8x128xi32>
    %c3_i32 = arith.constant 3 : i32
    %11 = vector.broadcast %c3_i32 : i32 to vector<8x128xi32>
    %12 = arith.andi %3, %11 : vector<8x128xi32>
    %c3_i32_5 = arith.constant 3 : i32
    %13 = vector.broadcast %c3_i32_5 : i32 to vector<8x128xi32>
    %14 = arith.shli %12, %13 : vector<8x128xi32>
    %15 = arith.shli %7, %14 : vector<8x128xi32>
    %c3_i32_6 = arith.constant 3 : i32
    %16 = vector.broadcast %c3_i32_6 : i32 to vector<8x128xi32>
    %17 = arith.andi %4, %16 : vector<8x128xi32>
    %c3_i32_7 = arith.constant 3 : i32
    %18 = vector.broadcast %c3_i32_7 : i32 to vector<8x128xi32>
    %19 = arith.shli %17, %18 : vector<8x128xi32>
    %20 = arith.shli %10, %19 : vector<8x128xi32>
    %21 = arith.cmpi eq, %3, %4 : vector<8x128xi32>
    %c0_i32_8 = arith.constant 0 : i32
    %22 = vector.broadcast %c0_i32_8 : i32 to vector<8x128xi32>
    %23 = arith.select %21, %15, %22 : vector<8x128xi1>, vector<8x128xi32>
    %cst = arith.constant dense<0> : vector<128xi32>
    %24 = vector.multi_reduction <add>, %15, %cst [0] : vector<8x128xi32> to vector<128xi32>
    %25 = vector.shape_cast %24 : vector<128xi32> to vector<1x128xi32>
    %cst_9 = arith.constant dense<0> : vector<128xi32>
    %26 = vector.multi_reduction <add>, %20, %cst_9 [0] : vector<8x128xi32> to vector<128xi32>
    %27 = vector.shape_cast %26 : vector<128xi32> to vector<1x128xi32>
    %cst_10 = arith.constant dense<0> : vector<128xi32>
    %28 = vector.multi_reduction <add>, %23, %cst_10 [0] : vector<8x128xi32> to vector<128xi32>
    %29 = vector.shape_cast %28 : vector<128xi32> to vector<1x128xi32>
    %c0_11 = arith.constant 0 : index
    %c0_12 = arith.constant 0 : index
    %30 = vector.load %arg7[%c0_11, %c0_12] : memref<8x128xi32, #tpu.memory_space<vmem>>, vector<1x128xi32>
    %c0_i32_13 = arith.constant 0 : i32
    %31 = vector.broadcast %c0_i32_13 : i32 to vector<1x128xi32>
    %32 = arith.shrsi %29, %31 : vector<1x128xi32>
    %c255_i32 = arith.constant 255 : i32
    %33 = vector.broadcast %c255_i32 : i32 to vector<1x128xi32>
    %34 = arith.andi %32, %33 : vector<1x128xi32>
    %35 = arith.addi %30, %34 : vector<1x128xi32>
    %c0_14 = arith.constant 0 : index
    %c0_15 = arith.constant 0 : index
    %36 = vector.load %arg7[%c0_14, %c0_15] : memref<8x128xi32, #tpu.memory_space<vmem>>, vector<1x128xi32>
    tpu.vector_store %arg7[%c0_14, %c0_15], %35 {strides = array<i32>} : memref<8x128xi32, #tpu.memory_space<vmem>>, vector<1x128xi32>,
    %c0_16 = arith.constant 0 : index
    %c0_17 = arith.constant 0 : index
    %37 = vector.load %arg8[%c0_16, %c0_17] : memref<8x128xi32, #tpu.memory_space<vmem>>, vector<1x128xi32>
    %c0_i32_18 = arith.constant 0 : i32
    %38 = vector.broadcast %c0_i32_18 : i32 to vector<1x128xi32>
    %39 = arith.shrsi %25, %38 : vector<1x128xi32>
    %c255_i32_19 = arith.constant 255 : i32
    %40 = vector.broadcast %c255_i32_19 : i32 to vector<1x128xi32>
    %41 = arith.andi %39, %40 : vector<1x128xi32>
    %42 = arith.addi %37, %41 : vector<1x128xi32>
    %c0_20 = arith.constant 0 : index
    %c0_21 = arith.constant 0 : index
    %43 = vector.load %arg8[%c0_20, %c0_21] : memref<8x128xi32, #tpu.memory_space<vmem>>, vector<1x128xi32>
    tpu.vector_store %arg8[%c0_20, %c0_21], %42 {strides = array<i32>} : memref<8x128xi32, #tpu.memory_space<vmem>>, vector<1x128xi32>,
    %c0_22 = arith.constant 0 : index
    %c0_23 = arith.constant 0 : index
    %44 = vector.load %arg9[%c0_22, %c0_23] : memref<8x128xi32, #tpu.memory_space<vmem>>, vector<1x128xi32>
    %c0_i32_24 = arith.constant 0 : i32
    %45 = vector.broadcast %c0_i32_24 : i32 to vector<1x128xi32>
    %46 = arith.shrsi %27, %45 : vector<1x128xi32>
    %c255_i32_25 = arith.constant 255 : i32
    %47 = vector.broadcast %c255_i32_25 : i32 to vector<1x128xi32>
    %48 = arith.andi %46, %47 : vector<1x128xi32>
    %49 = arith.addi %44, %48 : vector<1x128xi32>
    %c0_26 = arith.constant 0 : index
    %c0_27 = arith.constant 0 : index
    %50 = vector.load %arg9[%c0_26, %c0_27] : memref<8x128xi32, #tpu.memory_space<vmem>>, vector<1x128xi32>
    tpu.vector_store %arg9[%c0_26, %c0_27], %49 {strides = array<i32>} : memref<8x128xi32, #tpu.memory_space<vmem>>, vector<1x128xi32>,
    %c1 = arith.constant 1 : index
    %c0_28 = arith.constant 0 : index
    %51 = vector.load %arg7[%c1, %c0_28] : memref<8x128xi32, #tpu.memory_space<vmem>>, vector<1x128xi32>
    %c8_i32 = arith.constant 8 : i32
    %52 = vector.broadcast %c8_i32 : i32 to vector<1x128xi32>
    %53 = arith.shrsi %29, %52 : vector<1x128xi32>
    %c255_i32_29 = arith.constant 255 : i32
    %54 = vector.broadcast %c255_i32_29 : i32 to vector<1x128xi32>
    %55 = arith.andi %53, %54 : vector<1x128xi32>
    %56 = arith.addi %51, %55 : vector<1x128xi32>
    %c1_30 = arith.constant 1 : index
    %c0_31 = arith.constant 0 : index
    %57 = vector.load %arg7[%c1_30, %c0_31] : memref<8x128xi32, #tpu.memory_space<vmem>>, vector<1x128xi32>
    tpu.vector_store %arg7[%c1_30, %c0_31], %56 {strides = array<i32>} : memref<8x128xi32, #tpu.memory_space<vmem>>, vector<1x128xi32>,
    %c1_32 = arith.constant 1 : index
    %c0_33 = arith.constant 0 : index
    %58 = vector.load %arg8[%c1_32, %c0_33] : memref<8x128xi32, #tpu.memory_space<vmem>>, vector<1x128xi32>
    %c8_i32_34 = arith.constant 8 : i32
    %59 = vector.broadcast %c8_i32_34 : i32 to vector<1x128xi32>
    %60 = arith.shrsi %25, %59 : vector<1x128xi32>
    %c255_i32_35 = arith.constant 255 : i32
    %61 = vector.broadcast %c255_i32_35 : i32 to vector<1x128xi32>
    %62 = arith.andi %60, %61 : vector<1x128xi32>
    %63 = arith.addi %58, %62 : vector<1x128xi32>
    %c1_36 = arith.constant 1 : index
    %c0_37 = arith.constant 0 : index
    %64 = vector.load %arg8[%c1_36, %c0_37] : memref<8x128xi32, #tpu.memory_space<vmem>>, vector<1x128xi32>
    tpu.vector_store %arg8[%c1_36, %c0_37], %63 {strides = array<i32>} : memref<8x128xi32, #tpu.memory_space<vmem>>, vector<1x128xi32>,
    %c1_38 = arith.constant 1 : index
    %c0_39 = arith.constant 0 : index
    %65 = vector.load %arg9[%c1_38, %c0_39] : memref<8x128xi32, #tpu.memory_space<vmem>>, vector<1x128xi32>
    %c8_i32_40 = arith.constant 8 : i32
    %66 = vector.broadcast %c8_i32_40 : i32 to vector<1x128xi32>
    %67 = arith.shrsi %27, %66 : vector<1x128xi32>
    %c255_i32_41 = arith.constant 255 : i32
    %68 = vector.broadcast %c255_i32_41 : i32 to vector<1x128xi32>
    %69 = arith.andi %67, %68 : vector<1x128xi32>
    %70 = arith.addi %65, %69 : vector<1x128xi32>
    %c1_42 = arith.constant 1 : index
    %c0_43 = arith.constant 0 : index
    %71 = vector.load %arg9[%c1_42, %c0_43] : memref<8x128xi32, #tpu.memory_space<vmem>>, vector<1x128xi32>
    tpu.vector_store %arg9[%c1_42, %c0_43], %70 {strides = array<i32>} : memref<8x128xi32, #tpu.memory_space<vmem>>, vector<1x128xi32>,
    %c2 = arith.constant 2 : index
    %c0_44 = arith.constant 0 : index
    %72 = vector.load %arg7[%c2, %c0_44] : memref<8x128xi32, #tpu.memory_space<vmem>>, vector<1x128xi32>
    %c16_i32 = arith.constant 16 : i32
    %73 = vector.broadcast %c16_i32 : i32 to vector<1x128xi32>
    %74 = arith.shrsi %29, %73 : vector<1x128xi32>
    %c255_i32_45 = arith.constant 255 : i32
    %75 = vector.broadcast %c255_i32_45 : i32 to vector<1x128xi32>
    %76 = arith.andi %74, %75 : vector<1x128xi32>
    %77 = arith.addi %72, %76 : vector<1x128xi32>
    %c2_46 = arith.constant 2 : index
    %c0_47 = arith.constant 0 : index
    %78 = vector.load %arg7[%c2_46, %c0_47] : memref<8x128xi32, #tpu.memory_space<vmem>>, vector<1x128xi32>
    tpu.vector_store %arg7[%c2_46, %c0_47], %77 {strides = array<i32>} : memref<8x128xi32, #tpu.memory_space<vmem>>, vector<1x128xi32>,
    %c2_48 = arith.constant 2 : index
    %c0_49 = arith.constant 0 : index
    %79 = vector.load %arg8[%c2_48, %c0_49] : memref<8x128xi32, #tpu.memory_space<vmem>>, vector<1x128xi32>
    %c16_i32_50 = arith.constant 16 : i32
    %80 = vector.broadcast %c16_i32_50 : i32 to vector<1x128xi32>
    %81 = arith.shrsi %25, %80 : vector<1x128xi32>
    %c255_i32_51 = arith.constant 255 : i32
    %82 = vector.broadcast %c255_i32_51 : i32 to vector<1x128xi32>
    %83 = arith.andi %81, %82 : vector<1x128xi32>
    %84 = arith.addi %79, %83 : vector<1x128xi32>
    %c2_52 = arith.constant 2 : index
    %c0_53 = arith.constant 0 : index
    %85 = vector.load %arg8[%c2_52, %c0_53] : memref<8x128xi32, #tpu.memory_space<vmem>>, vector<1x128xi32>
    tpu.vector_store %arg8[%c2_52, %c0_53], %84 {strides = array<i32>} : memref<8x128xi32, #tpu.memory_space<vmem>>, vector<1x128xi32>,
    %c2_54 = arith.constant 2 : index
    %c0_55 = arith.constant 0 : index
    %86 = vector.load %arg9[%c2_54, %c0_55] : memref<8x128xi32, #tpu.memory_space<vmem>>, vector<1x128xi32>
    %c16_i32_56 = arith.constant 16 : i32
    %87 = vector.broadcast %c16_i32_56 : i32 to vector<1x128xi32>
    %88 = arith.shrsi %27, %87 : vector<1x128xi32>
    %c255_i32_57 = arith.constant 255 : i32
    %89 = vector.broadcast %c255_i32_57 : i32 to vector<1x128xi32>
    %90 = arith.andi %88, %89 : vector<1x128xi32>
    %91 = arith.addi %86, %90 : vector<1x128xi32>
    %c2_58 = arith.constant 2 : index
    %c0_59 = arith.constant 0 : index
    %92 = vector.load %arg9[%c2_58, %c0_59] : memref<8x128xi32, #tpu.memory_space<vmem>>, vector<1x128xi32>
    tpu.vector_store %arg9[%c2_58, %c0_59], %91 {strides = array<i32>} : memref<8x128xi32, #tpu.memory_space<vmem>>, vector<1x128xi32>,
    %c3 = arith.constant 3 : index
    %c0_60 = arith.constant 0 : index
    %93 = vector.load %arg7[%c3, %c0_60] : memref<8x128xi32, #tpu.memory_space<vmem>>, vector<1x128xi32>
    %c24_i32 = arith.constant 24 : i32
    %94 = vector.broadcast %c24_i32 : i32 to vector<1x128xi32>
    %95 = arith.shrsi %29, %94 : vector<1x128xi32>
    %c255_i32_61 = arith.constant 255 : i32
    %96 = vector.broadcast %c255_i32_61 : i32 to vector<1x128xi32>
    %97 = arith.andi %95, %96 : vector<1x128xi32>
    %98 = arith.addi %93, %97 : vector<1x128xi32>
    %c3_62 = arith.constant 3 : index
    %c0_63 = arith.constant 0 : index
    %99 = vector.load %arg7[%c3_62, %c0_63] : memref<8x128xi32, #tpu.memory_space<vmem>>, vector<1x128xi32>
    tpu.vector_store %arg7[%c3_62, %c0_63], %98 {strides = array<i32>} : memref<8x128xi32, #tpu.memory_space<vmem>>, vector<1x128xi32>,
    %c3_64 = arith.constant 3 : index
    %c0_65 = arith.constant 0 : index
    %100 = vector.load %arg8[%c3_64, %c0_65] : memref<8x128xi32, #tpu.memory_space<vmem>>, vector<1x128xi32>
    %c24_i32_66 = arith.constant 24 : i32
    %101 = vector.broadcast %c24_i32_66 : i32 to vector<1x128xi32>
    %102 = arith.shrsi %25, %101 : vector<1x128xi32>
    %c255_i32_67 = arith.constant 255 : i32
    %103 = vector.broadcast %c255_i32_67 : i32 to vector<1x128xi32>
    %104 = arith.andi %102, %103 : vector<1x128xi32>
    %105 = arith.addi %100, %104 : vector<1x128xi32>
    %c3_68 = arith.constant 3 : index
    %c0_69 = arith.constant 0 : index
    %106 = vector.load %arg8[%c3_68, %c0_69] : memref<8x128xi32, #tpu.memory_space<vmem>>, vector<1x128xi32>
    tpu.vector_store %arg8[%c3_68, %c0_69], %105 {strides = array<i32>} : memref<8x128xi32, #tpu.memory_space<vmem>>, vector<1x128xi32>,
    %c3_70 = arith.constant 3 : index
    %c0_71 = arith.constant 0 : index
    %107 = vector.load %arg9[%c3_70, %c0_71] : memref<8x128xi32, #tpu.memory_space<vmem>>, vector<1x128xi32>
    %c24_i32_72 = arith.constant 24 : i32
    %108 = vector.broadcast %c24_i32_72 : i32 to vector<1x128xi32>
    %109 = arith.shrsi %27, %108 : vector<1x128xi32>
    %c255_i32_73 = arith.constant 255 : i32
    %110 = vector.broadcast %c255_i32_73 : i32 to vector<1x128xi32>
    %111 = arith.andi %109, %110 : vector<1x128xi32>
    %112 = arith.addi %107, %111 : vector<1x128xi32>
    %c3_74 = arith.constant 3 : index
    %c0_75 = arith.constant 0 : index
    %113 = vector.load %arg9[%c3_74, %c0_75] : memref<8x128xi32, #tpu.memory_space<vmem>>, vector<1x128xi32>
    tpu.vector_store %arg9[%c3_74, %c0_75], %112 {strides = array<i32>} : memref<8x128xi32, #tpu.memory_space<vmem>>, vector<1x128xi32>,
    %c0_i32_76 = arith.constant 0 : i32
    %114 = arith.cmpi eq, %arg1, %c0_i32_76 : i32
    %115 = arith.extui %114 : i1 to i32
    %c0_i32_77 = arith.constant 0 : i32
    %116 = arith.cmpi ne, %115, %c0_i32_77 : i32
    scf.if %116 {
      %c0_78 = arith.constant 0 : index
      %c0_79 = arith.constant 0 : index
      %117 = vector.load %arg7[%c0_78, %c0_79] : memref<8x128xi32, #tpu.memory_space<vmem>>, vector<8x128xi32>
      %cst_80 = arith.constant dense<0> : vector<8xi32>
      %118 = vector.multi_reduction <add>, %117, %cst_80 [1] : vector<8x128xi32> to vector<8xi32>
      %119 = vector.shape_cast %118 : vector<8xi32> to vector<8x1xi32>
      %c0_81 = arith.constant 0 : index
      %c0_82 = arith.constant 0 : index
      %c0_83 = arith.constant 0 : index
      %120 = vector.load %arg4[%c0_81, %c0_82, %c0_83] : memref<1x8x1xi32, #tpu.memory_space<vmem>>, vector<1x8x1xi32>
      %121 = vector.shape_cast %120 : vector<1x8x1xi32> to vector<8x1xi32>
      %122 = vector.shape_cast %119 : vector<8x1xi32> to vector<1x8x1xi32>
      tpu.vector_store %arg4[%c0_81, %c0_82, %c0_83], %122 {strides = array<i32>} : memref<1x8x1xi32, #tpu.memory_space<vmem>>, vector<1x8x1xi32>,
      %c0_84 = arith.constant 0 : index
      %c0_85 = arith.constant 0 : index
      %123 = vector.load %arg8[%c0_84, %c0_85] : memref<8x128xi32, #tpu.memory_space<vmem>>, vector<8x128xi32>
      %cst_86 = arith.constant dense<0> : vector<8xi32>
      %124 = vector.multi_reduction <add>, %123, %cst_86 [1] : vector<8x128xi32> to vector<8xi32>
      %125 = vector.shape_cast %124 : vector<8xi32> to vector<8x1xi32>
      %c0_87 = arith.constant 0 : index
      %c0_88 = arith.constant 0 : index
      %c0_89 = arith.constant 0 : index
      %126 = vector.load %arg5[%c0_87, %c0_88, %c0_89] : memref<1x8x1xi32, #tpu.memory_space<vmem>>, vector<1x8x1xi32>
      %127 = vector.shape_cast %126 : vector<1x8x1xi32> to vector<8x1xi32>
      %128 = vector.shape_cast %125 : vector<8x1xi32> to vector<1x8x1xi32>
      tpu.vector_store %arg5[%c0_87, %c0_88, %c0_89], %128 {strides = array<i32>} : memref<1x8x1xi32, #tpu.memory_space<vmem>>, vector<1x8x1xi32>,
      %c0_90 = arith.constant 0 : index
      %c0_91 = arith.constant 0 : index
      %129 = vector.load %arg9[%c0_90, %c0_91] : memref<8x128xi32, #tpu.memory_space<vmem>>, vector<8x128xi32>
      %cst_92 = arith.constant dense<0> : vector<8xi32>
      %130 = vector.multi_reduction <add>, %129, %cst_92 [1] : vector<8x128xi32> to vector<8xi32>
      %131 = vector.shape_cast %130 : vector<8xi32> to vector<8x1xi32>
      %c0_93 = arith.constant 0 : index
      %c0_94 = arith.constant 0 : index
      %c0_95 = arith.constant 0 : index
      %132 = vector.load %arg6[%c0_93, %c0_94, %c0_95] : memref<1x8x1xi32, #tpu.memory_space<vmem>>, vector<1x8x1xi32>
      %133 = vector.shape_cast %132 : vector<1x8x1xi32> to vector<8x1xi32>
      %134 = vector.shape_cast %131 : vector<8x1xi32> to vector<1x8x1xi32>
      tpu.vector_store %arg6[%c0_93, %c0_94, %c0_95], %134 {strides = array<i32>} : memref<1x8x1xi32, #tpu.memory_space<vmem>>, vector<1x8x1xi32>,
    } else {
    }
    return
  }
  func.func @transform_0(%arg0: i32, %arg1: i32) -> (i32, i32) {
    %c1_i32 = arith.constant 1 : i32
    %0 = arith.muli %arg0, %c1_i32 : i32
    %1 = arith.addi %0, %arg1 : i32
    %c0_i32 = arith.constant 0 : i32
    %c0_i32_0 = arith.constant 0 : i32
    return %1, %c0_i32 : i32, i32
  }
  func.func @transform_1(%arg0: i32, %arg1: i32) -> (i32, i32) {
    %c1_i32 = arith.constant 1 : i32
    %0 = arith.muli %arg0, %c1_i32 : i32
    %1 = arith.addi %0, %arg1 : i32
    %c0_i32 = arith.constant 0 : i32
    %c0_i32_0 = arith.constant 0 : i32
    return %1, %c0_i32 : i32, i32
  }
  func.func @transform_2(%arg0: i32, %arg1: i32) -> (i32, i32, i32) {
    %c0_i32 = arith.constant 0 : i32
    %c0_i32_0 = arith.constant 0 : i32
    %c0_i32_1 = arith.constant 0 : i32
    return %arg0, %c0_i32, %c0_i32_0 : i32, i32, i32
  }
  func.func @transform_3(%arg0: i32, %arg1: i32) -> (i32, i32, i32) {
    %c0_i32 = arith.constant 0 : i32
    %c0_i32_0 = arith.constant 0 : i32
    %c0_i32_1 = arith.constant 0 : i32
    return %arg0, %c0_i32, %c0_i32_0 : i32, i32, i32
  }
  func.func @transform_4(%arg0: i32, %arg1: i32) -> (i32, i32, i32) {
    %c0_i32 = arith.constant 0 : i32
    %c0_i32_0 = arith.constant 0 : i32
    %c0_i32_1 = arith.constant 0 : i32
    return %arg0, %c0_i32, %c0_i32_0 : i32, i32, i32
  }
}

</mosaic_0001>

<llo_original>
// kernel: tpu_custom_call.1
$region0: #{tpu_custom_call.1}
  #allocation0 [shape = 'u32[]', space=smem, size = 0x4, offset = 0x4, fixed_abs, tag = 'smem constant byte address 0x4 - core index']
  #allocation1 [shape = 'u32[144,128]{1,0:T(1,128)}', space=vmem, size = 0x12000, scoped, tag = 'internal scratch']
  #allocation2 [shape = 's32[8,128]{1,0:T(8,128)}', space=vmem, size = 0x1000, scoped, tag = 'scratch operand']
  #allocation3 [shape = 's32[8,128]{1,0:T(8,128)}', space=vmem, size = 0x1000, scoped, tag = 'scratch operand']
  #allocation4 [shape = 's32[8,128]{1,0:T(8,128)}', space=vmem, size = 0x1000, scoped, tag = 'scratch operand']
  %s0 = inlined_call_operand.hbm [shape: s32[8,128], index: 0, kind: input, shape index: {}]
  %s1 = inlined_call_operand.hbm [shape: s32[8,128], index: 1, kind: input, shape index: {}]
  %s2 = inlined_call_operand.vmem [shape: s32[1,8,1], index: 2, kind: output, shape index: {0}]
  %s3 = inlined_call_operand.vmem [shape: s32[1,8,1], index: 3, kind: output, shape index: {1}]
  %s4 = inlined_call_operand.vmem [shape: s32[1,8,1], index: 4, kind: output, shape index: {2}]
  %5 = xla_tuple %s2, %s3, %s4
  %s6 = sld [smem:[#allocation0]]
  $region50: #{tpu_custom_call.1} parent=0
    _
  %s8 = ssub.s32 1, %s6
  %s9 = scalar_select 0, %s8, %s6
  $region1: #{tpu_custom_call.1} parent=0
    #allocation5 [shape = 'u8[4096]{0}', space=vmem, size = 0x1000, scoped, tag = 'input window, operand 0, single buffered']
    #allocation6 [shape = 's32[1]{0}', space=sflag, size = 0x4, scoped, tag = 'scoped memory for tpu_custom_call.1']
    #allocation7 [shape = 'u8[4096]{0}', space=vmem, size = 0x1000, scoped, tag = 'input window, operand 1, single buffered']
    #allocation8 [shape = 's32[1]{0}', space=sflag, size = 0x4, scoped, tag = 'scoped memory for tpu_custom_call.1']
    %10 = vsyncpa [#allocation6], 0
    %11 = vsyncpa [#allocation8], 0
    // Predicated region
    $region2: #{tpu_custom_call.1} parent=1 // pred_check
      _
    $region3: #{tpu_custom_call.1} parent=1 // pred_check_branch
      %13 = sbr.rel (0) target = $region5
    $region4: #{tpu_custom_call.1} parent=1 // pred_region
      %s14 = sadd.s32 0, 0
      %s16 = ssub.s32 128, 128
      %17 = vsyncadd [#allocation6], %s16
      %s18 = smul.addr %s14, 128
      %s19 = scalar_lea.hbm %s0, %s18
      %s21 = sshll.u32 [#allocation5], 4
      %s22 = int_to_ptr.vmem [resolvable:$true] %s21
      %24 = dma.hbm_to_vmem [thread:$0]  %s19, 128, %s22, [#allocation6]
    $region5: #{tpu_custom_call.1} parent=1 // pred_fallthru
      _
    // Predicated region
    $region6: #{tpu_custom_call.1} parent=1 // pred_check
      _
    $region7: #{tpu_custom_call.1} parent=1 // pred_check_branch
      %26 = sbr.rel (0) target = $region9
    $region8: #{tpu_custom_call.1} parent=1 // pred_region
      %s27 = sadd.s32 0, 0
      %s29 = ssub.s32 128, 128
      %30 = vsyncadd [#allocation8], %s29
      %s31 = smul.addr %s27, 128
      %s32 = scalar_lea.hbm %s1, %s31
      %s34 = sshll.u32 [#allocation7], 4
      %s35 = int_to_ptr.vmem [resolvable:$true] %s34
      %37 = dma.hbm_to_vmem [thread:$0]  %s32, 128, %s35, [#allocation8]
    $region9: #{tpu_custom_call.1} parent=1 // pred_fallthru
      _
    // Predicated region
    $region10: #{tpu_custom_call.1} parent=1 // pred_check
      _
    $region11: #{tpu_custom_call.1} parent=1 // pred_check_branch
      %39 = sbr.rel (0) target = $region13
    $region12: #{tpu_custom_call.1} parent=1 // pred_region
      %40 = dma.done [#allocation6], 128
    $region13: #{tpu_custom_call.1} parent=1 // pred_fallthru
      _
    // Predicated region
    $region14: #{tpu_custom_call.1} parent=1 // pred_check
      _
    $region15: #{tpu_custom_call.1} parent=1 // pred_check_branch
      %42 = sbr.rel (0) target = $region17
    $region16: #{tpu_custom_call.1} parent=1 // pred_region
      %43 = dma.done [#allocation8], 128
    $region17: #{tpu_custom_call.1} parent=1 // pred_fallthru
      _
    %s44 = sadd.s32 0, 0
    %s45 = sadd.s32 0, 0
    %p46 = scmp.eq.s32.totalorder 0, 0
    // Predicated region
    $region18: #{tpu_custom_call.1} parent=1 // pred_check
      %p47 = pneg %p46
    $region19: #{tpu_custom_call.1} parent=1 // pred_check_branch
      %49 = sbr.rel (%p47) target = $region21
    $region20: #{tpu_custom_call.1} parent=1 // pred_region
      %50 = vst [vmem:[#allocation2] sm:$0xff] 0
      %51 = vst [vmem:[#allocation3] sm:$0xff] 0
      %52 = vst [vmem:[#allocation4] sm:$0xff] 0
    $region21: #{tpu_custom_call.1} parent=1 // pred_fallthru
      _
    %v53 = vld [vmem:[#allocation5] sm:$0xff]
    %v54 = vld [vmem:[#allocation7] sm:$0xff]
    %vm55 = vcmp.lt.s32.totalorder %v53, 4
    %v56 = vsel %vm55, 1, 0
    %vm57 = vcmp.lt.s32.totalorder %v54, 4
    %v58 = vsel %vm57, 1, 0
    %v59 = vand.u32 %v53, 3
    %v60 = vshll.u32 %v59, 3
    %v61 = vshll.u32 %v56, %v60
    %v62 = vand.u32 %v54, 3
    %v63 = vshll.u32 %v62, 3
    %v64 = vshll.u32 %v58, %v63
    %vm65 = vcmp.eq.s32.totalorder %v53, %v54
    %v66 = vsel %vm65, %v61, 0
    %v67 = vrot.slane %v61, 4
    %v68 = vadd.s32 %v61, %v67
    %v69 = vrot.slane %v68, 2
    %v70 = vadd.s32 %v68, %v69
    %v71 = vrot.slane %v70, 1
    %v72 = vadd.s32 %v70, %v71
    %v73 = vrot.slane %v64, 4
    %v74 = vadd.s32 %v64, %v73
    %v75 = vrot.slane %v74, 2
    %v76 = vadd.s32 %v74, %v75
    %v77 = vrot.slane %v76, 1
    %v78 = vadd.s32 %v76, %v77
    %v79 = vrot.slane %v66, 4
    %v80 = vadd.s32 %v66, %v79
    %v81 = vrot.slane %v80, 2
    %v82 = vadd.s32 %v80, %v81
    %v83 = vrot.slane %v82, 1
    %v84 = vadd.s32 %v82, %v83
    %v85 = vld [vmem:[#allocation2] sm:$0x1]
    %v86 = vand.u32 %v84, 255
    %v87 = vadd.s32 %v85, %v86
    %88 = vst [vmem:[#allocation2] sm:$0x1] %v87
    %v89 = vld [vmem:[#allocation3] sm:$0x1]
    %v90 = vand.u32 %v72, 255
    %v91 = vadd.s32 %v89, %v90
    %92 = vst [vmem:[#allocation3] sm:$0x1] %v91
    %v93 = vld [vmem:[#allocation4] sm:$0x1]
    %v94 = vand.u32 %v78, 255
    %v95 = vadd.s32 %v93, %v94
    %96 = vst [vmem:[#allocation4] sm:$0x1] %v95
    %v97 = vld [vmem:[#allocation2 + $0x1] sm:$0x1]
    %v98 = vshra.s32 %v84, 8
    %v99 = vand.u32 %v98, 255
    %v100 = vadd.s32 %v97, %v99
    %101 = vst [vmem:[#allocation2 + $0x1] sm:$0x1] %v100
    %v102 = vld [vmem:[#allocation3 + $0x1] sm:$0x1]
    %v103 = vshra.s32 %v72, 8
    %v104 = vand.u32 %v103, 255
    %v105 = vadd.s32 %v102, %v104
    %106 = vst [vmem:[#allocation3 + $0x1] sm:$0x1] %v105
    %v107 = vld [vmem:[#allocation4 + $0x1] sm:$0x1]
    %v108 = vshra.s32 %v78, 8
    %v109 = vand.u32 %v108, 255
    %v110 = vadd.s32 %v107, %v109
    %111 = vst [vmem:[#allocation4 + $0x1] sm:$0x1] %v110
    %v112 = vld [vmem:[#allocation2 + $0x2] sm:$0x1]
    %v113 = vshra.s32 %v84, 16
    %v114 = vand.u32 %v113, 255
    %v115 = vadd.s32 %v112, %v114
    %116 = vst [vmem:[#allocation2 + $0x2] sm:$0x1] %v115
    %v117 = vld [vmem:[#allocation3 + $0x2] sm:$0x1]
    %v118 = vshra.s32 %v72, 16
    %v119 = vand.u32 %v118, 255
    %v120 = vadd.s32 %v117, %v119
    %121 = vst [vmem:[#allocation3 + $0x2] sm:$0x1] %v120
    %v122 = vld [vmem:[#allocation4 + $0x2] sm:$0x1]
    %v123 = vshra.s32 %v78, 16
    %v124 = vand.u32 %v123, 255
    %v125 = vadd.s32 %v122, %v124
    %126 = vst [vmem:[#allocation4 + $0x2] sm:$0x1] %v125
    %v127 = vld [vmem:[#allocation2 + $0x3] sm:$0x1]
    %v128 = vshra.s32 %v84, 24
    %v129 = vand.u32 %v128, 255
    %v130 = vadd.s32 %v127, %v129
    %131 = vst [vmem:[#allocation2 + $0x3] sm:$0x1] %v130
    %v132 = vld [vmem:[#allocation3 + $0x3] sm:$0x1]
    %v133 = vshra.s32 %v72, 24
    %v134 = vand.u32 %v133, 255
    %v135 = vadd.s32 %v132, %v134
    %136 = vst [vmem:[#allocation3 + $0x3] sm:$0x1] %v135
    %v137 = vld [vmem:[#allocation4 + $0x3] sm:$0x1]
    %v138 = vshra.s32 %v78, 24
    %v139 = vand.u32 %v138, 255
    %v140 = vadd.s32 %v137, %v139
    %141 = vst [vmem:[#allocation4 + $0x3] sm:$0x1] %v140
    // Predicated region
    $region22: #{tpu_custom_call.1} parent=1 // pred_check
      %p142 = pneg %p46
    $region23: #{tpu_custom_call.1} parent=1 // pred_check_branch
      %144 = sbr.rel (%p142) target = $region25
    $region24: #{tpu_custom_call.1} parent=1 // pred_region
      %v145 = vld [vmem:[#allocation2] sm:$0xff]
      %v146 = vand.u32 %v145, 65535
      %v147 = vshrl.u32 %v145, 16
      %v148 = vcvt.s32.f32 %v146
      %v149 = vcvt.s32.f32 %v147
      %150 = vadd.xlane.f32.xlu0 %v148
      %v151 = vpop.xlane.xlu0 %150
      %152 = vadd.xlane.f32.xlu0 %v149
      %v153 = vpop.xlane.xlu0 %152
      %v154 = vcvt.f32.s32 %v151
      %v155 = vcvt.f32.s32 %v153
      %v156 = vshll.u32 %v155, 16
      %v157 = vadd.s32 %v156, %v154
      %vm158 = vcmask 7168
      %159 = vst.msk [vmem:[%s2] sm:$0xff] %vm158, %v157
      %v160 = vld [vmem:[#allocation3] sm:$0xff]
      %v161 = vand.u32 %v160, 65535
      %v162 = vshrl.u32 %v160, 16
      %v163 = vcvt.s32.f32 %v161
      %v164 = vcvt.s32.f32 %v162
      %165 = vadd.xlane.f32.xlu0 %v163
      %v166 = vpop.xlane.xlu0 %165
      %167 = vadd.xlane.f32.xlu0 %v164
      %v168 = vpop.xlane.xlu0 %167
      %v169 = vcvt.f32.s32 %v166
      %v170 = vcvt.f32.s32 %v168
      %v171 = vshll.u32 %v170, 16
      %v172 = vadd.s32 %v171, %v169
      %173 = vst.msk [vmem:[%s3] sm:$0xff] %vm158, %v172
      %v174 = vld [vmem:[#allocation4] sm:$0xff]
      %v175 = vand.u32 %v174, 65535
      %v176 = vshrl.u32 %v174, 16
      %v177 = vcvt.s32.f32 %v175
      %v178 = vcvt.s32.f32 %v176
      %179 = vadd.xlane.f32.xlu0 %v177
      %v180 = vpop.xlane.xlu0 %179
      %181 = vadd.xlane.f32.xlu0 %v178
      %v182 = vpop.xlane.xlu0 %181
      %v183 = vcvt.f32.s32 %v180
      %v184 = vcvt.f32.s32 %v182
      %v185 = vshll.u32 %v184, 16
      %v186 = vadd.s32 %v185, %v183
      %187 = vst.msk [vmem:[%s4] sm:$0xff] %vm158, %v186
    $region25: #{tpu_custom_call.1} parent=1 // pred_fallthru
      _
    // Predicated region
    $region26: #{tpu_custom_call.1} parent=1 // pred_check
      _
    $region27: #{tpu_custom_call.1} parent=1 // pred_check_branch
      %189 = sbr.rel (0) target = $region29
    $region28: #{tpu_custom_call.1} parent=1 // pred_region
      _
    $region29: #{tpu_custom_call.1} parent=1 // pred_fallthru
      _
    // Predicated region
    $region30: #{tpu_custom_call.1} parent=1 // pred_check
      _
    $region31: #{tpu_custom_call.1} parent=1 // pred_check_branch
      %191 = sbr.rel (0) target = $region33
    $region32: #{tpu_custom_call.1} parent=1 // pred_region
      _
    $region33: #{tpu_custom_call.1} parent=1 // pred_fallthru
      _
    // Predicated region
    $region34: #{tpu_custom_call.1} parent=1 // pred_check
      _
    $region35: #{tpu_custom_call.1} parent=1 // pred_check_branch
      %193 = sbr.rel (0) target = $region37
    $region36: #{tpu_custom_call.1} parent=1 // pred_region
      _
    $region37: #{tpu_custom_call.1} parent=1 // pred_fallthru
      _
    // Predicated region
    $region38: #{tpu_custom_call.1} parent=1 // pred_check
      _
    $region39: #{tpu_custom_call.1} parent=1 // pred_check_branch
      %195 = sbr.rel (0) target = $region41
    $region40: #{tpu_custom_call.1} parent=1 // pred_region
      _
    $region41: #{tpu_custom_call.1} parent=1 // pred_fallthru
      _
    // Predicated region
    $region42: #{tpu_custom_call.1} parent=1 // pred_check
      _
    $region43: #{tpu_custom_call.1} parent=1 // pred_check_branch
      %197 = sbr.rel (0) target = $region45
    $region44: #{tpu_custom_call.1} parent=1 // pred_region
      _
    $region45: #{tpu_custom_call.1} parent=1 // pred_fallthru
      _
    // Predicated region
    $region46: #{tpu_custom_call.1} parent=1 // pred_check
      _
    $region47: #{tpu_custom_call.1} parent=1 // pred_check_branch
      %199 = sbr.rel (0) target = $region49
    $region48: #{tpu_custom_call.1} parent=1 // pred_region
      _
    $region49: #{tpu_custom_call.1} parent=1 // pred_fallthru
      _
    %200 = vsyncpa [#allocation6], 1
    %201 = vsyncpa [#allocation8], 1

</llo_original>
